<compile_context>
chip_gen: v7x
topology: tpu7x:2x2x1
jax: 0.10.0
libtpu: 0.0.40
codegen_flags: <defaults>
</compile_context>

<pallas_src>
import jax
import jax.numpy as jnp
from jax.experimental import pallas as pl
from jax.experimental.pallas import tpu as pltpu
import numpy as np

_LANE = 128
_MAX_LANE_TILE = 2048  # big lane tiles amortize the ~0.35us/step pipeline overhead


def _round_up(a, b):
    return (a + b - 1) // b * b


def conv_stats_kernel(pT_ref, w_ref, o_ref, stats_ref):
    """Channel-major conv GEMM tile + per-image per-channel [sum, sum_sq] partials."""
    j = pl.program_id(1)
    # [C_out, K] @ [K, TL] -> [C_out, TL]  (M on the lane axis => lane-dense output)
    acc = jnp.dot(w_ref[...], pT_ref[0], preferred_element_type=jnp.float32)
    o_ref[0] = acc

    @pl.when(j == 0)
    def _():
        stats_ref[...] = jnp.zeros_like(stats_ref)

    s = jnp.sum(acc, axis=1, keepdims=True)          # [C_out, 1] lane reduce (XLU)
    q = jnp.sum(acc * acc, axis=1, keepdims=True)    # [C_out, 1]
    stats_ref[0] += jnp.concatenate([s, q], axis=1)  # [C_out, 2], resident across j


def bn_relu_kernel(x_ref, scale_ref, shift_ref, o_ref):
    """Fused BatchNorm (per-channel affine) + ReLU on a [C_out, TL] tile."""
    y = x_ref[0] * scale_ref[...] + shift_ref[...]
    o_ref[0] = jnp.maximum(y, 0.0)


def _im2col_cm(x, kh, kw, stride, padding, dilation):
    """x: [N, C, H, W] -> channel-major patches [N, C*kh*kw, Ho*Wo]."""
    N, C, H, W = x.shape
    Ho = (H + 2 * padding - dilation * (kh - 1) - 1) // stride + 1
    Wo = (W + 2 * padding - dilation * (kw - 1) - 1) // stride + 1
    xp = jnp.pad(x, ((0, 0), (0, 0), (padding, padding), (padding, padding)))
    cols = []
    for i in range(kh):
        for j in range(kw):
            h0 = i * dilation
            w0 = j * dilation
            sl = xp[:, :,
                    h0:h0 + stride * (Ho - 1) + 1:stride,
                    w0:w0 + stride * (Wo - 1) + 1:stride]   # [N, C, Ho, Wo]
            cols.append(sl)
    # stack along a new kh*kw axis after C, then flatten (C, kh, kw) -> K.
    # This matches PyTorch's weight.reshape(C_out, C_in*KH*KW) ordering.
    p = jnp.stack(cols, axis=2).reshape(N, C * kh * kw, Ho * Wo)
    return p, (Ho, Wo)


def cbr_forward(x, weight, gamma, beta, *, stride=1, padding=0, dilation=1,
                eps=1e-5):
    """x: [N, C_in, H, W] float32 (NCHW), weight: [C_out, C_in, KH, KW]."""
    C_out, C_in, KH, KW = weight.shape
    patches, (Ho, Wo) = _im2col_cm(x, KH, KW, stride, padding, dilation)
    N = x.shape[0]
    K = C_in * KH * KW
    HoWo = Ho * Wo

    # Lane tiling: pad Ho*Wo up to a multiple of 128 lanes, split into the fewest
    # tiles of width <= _MAX_LANE_TILE.  Padded (zero) columns produce exactly-zero
    # conv outputs, so they contribute nothing to sum / sum_sq.
    p128 = _round_up(HoWo, _LANE)
    n_tiles = max(1, -(-p128 // _MAX_LANE_TILE))
    TL = _round_up(-(-p128 // n_tiles), _LANE)
    P = TL * n_tiles
    if P > HoWo:
        patches = jnp.pad(patches, ((0, 0), (0, 0), (0, P - HoWo)))

    patches = patches.astype(jnp.float32)
    w2d = weight.reshape(C_out, K).astype(jnp.float32)   # [C_out, K]

    grid = (N, P // TL)

    conv_out, stats = pl.pallas_call(
        conv_stats_kernel,
        out_shape=(
            jax.ShapeDtypeStruct((N, C_out, P), jnp.float32),
            jax.ShapeDtypeStruct((N, C_out, 2), jnp.float32),
        ),
        grid_spec=pltpu.PrefetchScalarGridSpec(
            num_scalar_prefetch=0,
            grid=grid,
            in_specs=[
                pl.BlockSpec((1, K, TL), lambda n, j: (n, 0, j)),
                pl.BlockSpec((C_out, K), lambda n, j: (0, 0)),
            ],
            out_specs=(
                pl.BlockSpec((1, C_out, TL), lambda n, j: (n, 0, j)),
                pl.BlockSpec((1, C_out, 2), lambda n, j: (n, 0, 0)),
            ),
        ),
        compiler_params=pltpu.CompilerParams(
            dimension_semantics=("parallel", "arbitrary")),
    )(patches, w2d)

    # BatchNorm2d training-mode statistics (biased variance) over (N, Ho, Wo).
    # Per-image partials are combined here (cheap [N, C_out, 2] reduction).
    M = N * HoWo
    tot = jnp.sum(stats, axis=0)                       # [C_out, 2]
    mean = tot[:, 0] / M
    var = jnp.maximum(tot[:, 1] / M - mean * mean, 0.0)
    inv_std = jax.lax.rsqrt(var + eps)
    scale = (gamma * inv_std).astype(jnp.float32)      # [C_out]
    shift = (beta - mean * scale).astype(jnp.float32)  # [C_out]

    y = pl.pallas_call(
        bn_relu_kernel,
        out_shape=jax.ShapeDtypeStruct((N, C_out, P), jnp.float32),
        grid_spec=pltpu.PrefetchScalarGridSpec(
            num_scalar_prefetch=0,
            grid=grid,
            in_specs=[
                pl.BlockSpec((1, C_out, TL), lambda n, j: (n, 0, j)),
                pl.BlockSpec((C_out, 1), lambda n, j: (0, 0)),
                pl.BlockSpec((C_out, 1), lambda n, j: (0, 0)),
            ],
            out_specs=pl.BlockSpec((1, C_out, TL), lambda n, j: (n, 0, j)),
        ),
        compiler_params=pltpu.CompilerParams(
            dimension_semantics=("parallel", "parallel")),
    )(conv_out, scale.reshape(C_out, 1), shift.reshape(C_out, 1))

    if P > HoWo:
        y = y[:, :, :HoWo]
    # [N, C_out, Ho*Wo] is already NCHW ordering -> metadata-only reshape.
    return y.reshape(N, C_out, Ho, Wo)


def cbr_reference(x, weight, gamma, beta, *, stride=1, padding=1, dilation=1,
                  eps=1e-5):
    """Pure-JAX reference matching PyTorch CBR.forward (training-mode BN)."""
    conv = jax.lax.conv_general_dilated(
        x, weight,
        window_strides=(stride, stride),
        padding=[(padding, padding), (padding, padding)],
        rhs_dilation=(dilation, dilation),
        dimension_numbers=("NCHW", "OIHW", "NCHW"))
    mean = jnp.mean(conv, axis=(0, 2, 3), keepdims=True)
    var = jnp.mean((conv - mean) ** 2, axis=(0, 2, 3), keepdims=True)  # biased
    y = (conv - mean) / jnp.sqrt(var + eps)
    y = y * gamma.reshape(1, -1, 1, 1) + beta.reshape(1, -1, 1, 1)
    return jnp.maximum(y, 0.0)


if __name__ == "__main__":
    # CBR(in_channels=4, out_channels=8, kernel_size=3, stride=1, padding=1)
    N, C_in, H, W = 2, 4, 16, 16
    C_out, KH, KW = 8, 3, 3
    stride, padding, dilation = 1, 1, 1

    key = jax.random.PRNGKey(0)
    kx, kw_ = jax.random.split(key)
    x = jax.random.normal(kx, (N, C_in, H, W), dtype=jnp.float32)
    weight = jax.random.normal(kw_, (C_out, C_in, KH, KW), dtype=jnp.float32) * 0.1
    gamma = jnp.ones((C_out,), dtype=jnp.float32)   # BatchNorm2d default weight
    beta = jnp.zeros((C_out,), dtype=jnp.float32)   # BatchNorm2d default bias

    out = cbr_forward(x, weight, gamma, beta,
                      stride=stride, padding=padding, dilation=dilation)
    out = jax.block_until_ready(out)

    ref = cbr_reference(x, weight, gamma, beta,
                        stride=stride, padding=padding, dilation=dilation)
    np.testing.assert_allclose(np.asarray(out), np.asarray(ref),
                               rtol=1e-4, atol=1e-4)

    print("KERNEL_OK")
</pallas_src>

<mosaic_0001>
module attributes {stable_mosaic.version = 11 : i64} {
  func.func @conv_stats_kernel(%arg0: i32, %arg1: i32, %arg2: memref<1x36x256xf32, #tpu.memory_space<vmem>>, %arg3: memref<8x36xf32, #tpu.memory_space<vmem>>, %arg4: memref<1x8x256xf32, #tpu.memory_space<vmem>>, %arg5: memref<1x8x2xf32, #tpu.memory_space<vmem>>) attributes {dimension_semantics = [#tpu.dimension_semantics<parallel>, #tpu.dimension_semantics<arbitrary>], iteration_bounds = array<i64: 2, 1>, scalar_prefetch = 0 : i64, scratch_operands = 0 : i64, tpu.core_type = #tpu.core_type<tc>, window_params = [{transform_indices = @transform_0, window_bounds = array<i64: 1, 36, 256>}, {pipeline_mode = #tpu.pipeline_mode<synchronous>, transform_indices = @transform_1, window_bounds = array<i64: 8, 36>}, {transform_indices = @transform_2, window_bounds = array<i64: 1, 8, 256>}, {transform_indices = @transform_3, window_bounds = array<i64: 1, 8, 2>}]} {
    %c0 = arith.constant 0 : index
    %c0_0 = arith.constant 0 : index
    %0 = vector.load %arg3[%c0, %c0_0] : memref<8x36xf32, #tpu.memory_space<vmem>>, vector<8x36xf32>
    %c0_1 = arith.constant 0 : index
    %c0_2 = arith.constant 0 : index
    %c0_3 = arith.constant 0 : index
    %1 = vector.load %arg2[%c0_1, %c0_2, %c0_3] : memref<1x36x256xf32, #tpu.memory_space<vmem>>, vector<1x36x256xf32>
    %2 = vector.shape_cast %1 : vector<1x36x256xf32> to vector<36x256xf32>
    %cst = arith.constant dense<0.000000e+00> : vector<8x256xf32>
    %3 = tpu.matmul %0, %2, %cst {dimension_numbers = #tpu.dot_dimension_numbers<[1], [0], [0], [1], [0, 0, 1, 1], [], []>} : vector<8x36xf32>, vector<36x256xf32>, vector<8x256xf32> -> vector<8x256xf32>
    %c0_4 = arith.constant 0 : index
    %c0_5 = arith.constant 0 : index
    %c0_6 = arith.constant 0 : index
    %4 = vector.load %arg4[%c0_4, %c0_5, %c0_6] : memref<1x8x256xf32, #tpu.memory_space<vmem>>, vector<1x8x256xf32>
    %5 = vector.shape_cast %4 : vector<1x8x256xf32> to vector<8x256xf32>
    %6 = vector.shape_cast %3 : vector<8x256xf32> to vector<1x8x256xf32>
    tpu.vector_store %arg4[%c0_4, %c0_5, %c0_6], %6 {strides = array<i32>} : memref<1x8x256xf32, #tpu.memory_space<vmem>>, vector<1x8x256xf32>,
    %c0_i32 = arith.constant 0 : i32
    %7 = arith.cmpi eq, %arg1, %c0_i32 : i32
    %8 = arith.extui %7 : i1 to i32
    %c0_i32_7 = arith.constant 0 : i32
    %9 = arith.cmpi ne, %8, %c0_i32_7 : i32
    scf.if %9 {
      %cst_16 = arith.constant 0.000000e+00 : f32
      %22 = vector.broadcast %cst_16 : f32 to vector<1x8x2xf32>
      %c0_17 = arith.constant 0 : index
      %c0_18 = arith.constant 0 : index
      %c0_19 = arith.constant 0 : index
      %23 = vector.load %arg5[%c0_17, %c0_18, %c0_19] : memref<1x8x2xf32, #tpu.memory_space<vmem>>, vector<1x8x2xf32>
      tpu.vector_store %arg5[%c0_17, %c0_18, %c0_19], %22 {strides = array<i32>} : memref<1x8x2xf32, #tpu.memory_space<vmem>>, vector<1x8x2xf32>,
    } else {
    }
    %cst_8 = arith.constant dense<0.000000e+00> : vector<8xf32>
    %10 = vector.multi_reduction <add>, %3, %cst_8 [1] : vector<8x256xf32> to vector<8xf32>
    %11 = vector.shape_cast %10 : vector<8xf32> to vector<8x1xf32>
    %12 = arith.mulf %3, %3 : vector<8x256xf32>
    %cst_9 = arith.constant dense<0.000000e+00> : vector<8xf32>
    %13 = vector.multi_reduction <add>, %12, %cst_9 [1] : vector<8x256xf32> to vector<8xf32>
    %14 = vector.shape_cast %13 : vector<8xf32> to vector<8x1xf32>
    %c0_10 = arith.constant 0 : index
    %c0_11 = arith.constant 0 : index
    %c0_12 = arith.constant 0 : index
    %15 = vector.load %arg5[%c0_10, %c0_11, %c0_12] : memref<1x8x2xf32, #tpu.memory_space<vmem>>, vector<1x8x2xf32>
    %16 = vector.shape_cast %15 : vector<1x8x2xf32> to vector<8x2xf32>
    %17 = tpu.concatenate %11, %14 in 1 : vector<8x1xf32>, vector<8x1xf32> -> vector<8x2xf32>
    %18 = arith.addf %16, %17 : vector<8x2xf32>
    %c0_13 = arith.constant 0 : index
    %c0_14 = arith.constant 0 : index
    %c0_15 = arith.constant 0 : index
    %19 = vector.load %arg5[%c0_13, %c0_14, %c0_15] : memref<1x8x2xf32, #tpu.memory_space<vmem>>, vector<1x8x2xf32>
    %20 = vector.shape_cast %19 : vector<1x8x2xf32> to vector<8x2xf32>
    %21 = vector.shape_cast %18 : vector<8x2xf32> to vector<1x8x2xf32>
    tpu.vector_store %arg5[%c0_13, %c0_14, %c0_15], %21 {strides = array<i32>} : memref<1x8x2xf32, #tpu.memory_space<vmem>>, vector<1x8x2xf32>,
    return
  }
  func.func @transform_0(%arg0: i32, %arg1: i32) -> (i32, i32, i32) {
    %c0_i32 = arith.constant 0 : i32
    %c0_i32_0 = arith.constant 0 : i32
    return %arg0, %c0_i32, %arg1 : i32, i32, i32
  }
  func.func @transform_1(%arg0: i32, %arg1: i32) -> (i32, i32) {
    %c0_i32 = arith.constant 0 : i32
    %c0_i32_0 = arith.constant 0 : i32
    %c0_i32_1 = arith.constant 0 : i32
    return %c0_i32, %c0_i32_0 : i32, i32
  }
  func.func @transform_2(%arg0: i32, %arg1: i32) -> (i32, i32, i32) {
    %c0_i32 = arith.constant 0 : i32
    %c0_i32_0 = arith.constant 0 : i32
    return %arg0, %c0_i32, %arg1 : i32, i32, i32
  }
  func.func @transform_3(%arg0: i32, %arg1: i32) -> (i32, i32, i32) {
    %c0_i32 = arith.constant 0 : i32
    %c0_i32_0 = arith.constant 0 : i32
    %c0_i32_1 = arith.constant 0 : i32
    return %arg0, %c0_i32, %c0_i32_0 : i32, i32, i32
  }
}

</mosaic_0001>

<llo_original>
// kernel: tpu_custom_call.1
$region0: #{tpu_custom_call.1}
  #allocation0 [shape = 'u32[]', space=smem, size = 0x4, offset = 0x4, fixed_abs, tag = 'smem constant byte address 0x4 - core index']
  #allocation1 [shape = 'u32[144,128]{1,0:T(1,128)}', space=vmem, size = 0x12000, scoped, tag = 'internal scratch']
  %s0 = inlined_call_operand.vmem [shape: f32[2,36,256], index: 0, kind: input, shape index: {}]
  %s1 = inlined_call_operand.vmem [shape: f32[8,36], index: 1, kind: input, shape index: {}]
  %s2 = inlined_call_operand.hbm [shape: f32[2,8,256], index: 2, kind: output, shape index: {0}]
  %s3 = inlined_call_operand.vmem [shape: f32[2,8,2], index: 3, kind: output, shape index: {1}]
  %4 = xla_tuple %s2, %s3
  %s5 = sld [smem:[#allocation0]]
  $region53: #{tpu_custom_call.1} parent=0
    _
  %s7 = ssub.s32 1, %s5
  %s8 = scalar_select 0, %s7, %s5
  $region1: #{tpu_custom_call.1} parent=0
    #allocation2 [shape = 'u8[16384]{0}', space=vmem, size = 0x4000, scoped, tag = 'output window, operand 0']
    #allocation3 [shape = 's32[2]{0}', space=sflag, size = 0x8, scoped, tag = 'scoped memory for tpu_custom_call.1']
    %9 = vsyncpa [#allocation3], 0
    %s10 = scalar_lea.sflag [#allocation3], 1
    %11 = vsyncpa %s10, 0
    loop: start=0, step=1, limit=4
    $region2: #{tpu_custom_call.1} parent=1 // loop_pre_header
      _
    $region3: #{tpu_custom_call.1} parent=1 // loop_header
      %s13 = sphi 0, %s17
      %p14 = scmp.ge.s32.totalorder %s13, 4
      %s20 = sphi 0, %s32
      %s21 = sphi 0, %s28
      %s22 = sphi 0, %s20
      %s23 = sphi 0, %s21
      %s24 = sphi 0, %s22
      %s25 = sphi 0, %s23
      %s37 = sphi 0, %s39
      %s40 = sphi 0, %s37
      %s41 = sphi 0, %s40
      %s57 = sphi 0, %s41
      %s61 = sphi 0, %s61
      %s63 = sphi 0, %s61
      %s64 = sphi 0, %s63
      %s78 = sphi 0, %s64
      %s86 = sphi 0, %s88
      %s89 = sphi 0, %s86
      %s90 = sphi 0, %s89
      %s106 = sphi 0, %s90
      %s112 = sphi 0, %s114
      %s115 = sphi 0, %s112
      %s116 = sphi 0, %s115
      %s132 = sphi 0, %s116
    $region4: #{tpu_custom_call.1} parent=1 // loop_header_branch
      %16 = sbr.rel (%p14) target = $region8
    $region5: #{tpu_custom_call.1} parent=1 // loop_body
      %s18 = ssub.s32 %s13, 1
      %s19 = ssub.s32 %s13, 2
      %s26 = sadd.s32 1, %s21
      %p27 = scmp.ge.s32.totalorder %s26, 1
      %s28 = scalar_select %p27, 0, %s26
      %s29 = sadd.s32 1, %s20
      %s30 = scalar_select %p27, %s29, %s20
      %p31 = scmp.ge.s32.totalorder %s30, 2
      %s32 = scalar_select %p31, 0, %s30
      %s33 = ssub.s32 %s20, %s32
      %s34 = ssub.s32 %s21, %s28
      %s35 = sor.u32 %s33, %s34
      %p36 = scmp.eq.s32.totalorder %s35, 0
      %s38 = sadd.s32 %s37, 1
      %s39 = scalar_select %p36, %s37, %s38
      %p42 = pneg %p36
      %p43 = scmp.eq.s32.totalorder %s13, 1
      %p44 = por %p42, %p43
      %p45 = scmp.ne.s32.totalorder %s37, %s40
      %p46 = scmp.eq.s32.totalorder %s13, 0
      %p47 = por %p45, %p46
      %p48 = scmp.ne.s32.totalorder %s37, %s40
      %p49 = scmp.eq.s32.totalorder %s18, 1
      %p50 = por %p48, %p49
      %p51 = scmp.ne.s32.totalorder %s40, %s41
      %p52 = scmp.eq.s32.totalorder %s18, 0
      %p53 = por %p51, %p52
      %p54 = scmp.ne.s32.totalorder %s40, %s41
      %p55 = scmp.eq.s32.totalorder %s19, 1
      %p56 = por %p54, %p55
      %p58 = scmp.ne.s32.totalorder %s41, %s57
      %p59 = scmp.eq.s32.totalorder %s19, 0
      %p60 = por %p58, %p59
      %s62 = sadd.s32 %s61, 1
      %p65 = scmp.eq.s32.totalorder %s13, 1
      %p66 = scmp.ne.s32.totalorder %s61, %s63
      %p67 = scmp.eq.s32.totalorder %s13, 0
      %p68 = por %p66, %p67
      %p69 = scmp.ne.s32.totalorder %s61, %s63
      %p70 = scmp.eq.s32.totalorder %s18, 1
      %p71 = por %p69, %p70
      %p72 = scmp.ne.s32.totalorder %s63, %s64
      %p73 = scmp.eq.s32.totalorder %s18, 0
      %p74 = por %p72, %p73
      %p75 = scmp.ne.s32.totalorder %s63, %s64
      %p76 = scmp.eq.s32.totalorder %s19, 1
      %p77 = por %p75, %p76
      %p79 = scmp.ne.s32.totalorder %s64, %s78
      %p80 = scmp.eq.s32.totalorder %s19, 0
      %p81 = por %p79, %p80
      %s82 = ssub.s32 %s20, %s32
      %s83 = ssub.s32 %s21, %s28
      %s84 = sor.u32 %s82, %s83
      %p85 = scmp.eq.s32.totalorder %s84, 0
      %s87 = sadd.s32 %s86, 1
      %s88 = scalar_select %p85, %s86, %s87
      %p91 = pneg %p85
      %p92 = scmp.eq.s32.totalorder %s13, 1
      %p93 = por %p91, %p92
      %p94 = scmp.ne.s32.totalorder %s86, %s89
      %p95 = scmp.eq.s32.totalorder %s13, 0
      %p96 = por %p94, %p95
      %p97 = scmp.ne.s32.totalorder %s86, %s89
      %p98 = scmp.eq.s32.totalorder %s18, 1
      %p99 = por %p97, %p98
      %p100 = scmp.ne.s32.totalorder %s89, %s90
      %p101 = scmp.eq.s32.totalorder %s18, 0
      %p102 = por %p100, %p101
      %p103 = scmp.ne.s32.totalorder %s89, %s90
      %p104 = scmp.eq.s32.totalorder %s19, 1
      %p105 = por %p103, %p104
      %p107 = scmp.ne.s32.totalorder %s90, %s106
      %p108 = scmp.eq.s32.totalorder %s19, 0
      %p109 = por %p107, %p108
      %s110 = ssub.s32 %s20, %s32
      %p111 = scmp.eq.s32.totalorder %s110, 0
      %s113 = sadd.s32 %s112, 1
      %s114 = scalar_select %p111, %s112, %s113
      %p117 = pneg %p111
      %p118 = scmp.eq.s32.totalorder %s13, 1
      %p119 = por %p117, %p118
      %p120 = scmp.ne.s32.totalorder %s112, %s115
      %p121 = scmp.eq.s32.totalorder %s13, 0
      %p122 = por %p120, %p121
      %p123 = scmp.ne.s32.totalorder %s112, %s115
      %p124 = scmp.eq.s32.totalorder %s18, 1
      %p125 = por %p123, %p124
      %p126 = scmp.ne.s32.totalorder %s115, %s116
      %p127 = scmp.eq.s32.totalorder %s18, 0
      %p128 = por %p126, %p127
      %p129 = scmp.ne.s32.totalorder %s115, %s116
      %p130 = scmp.eq.s32.totalorder %s19, 1
      %p131 = por %p129, %p130
      %p133 = scmp.ne.s32.totalorder %s116, %s132
      %p134 = scmp.eq.s32.totalorder %s19, 0
      %p135 = por %p133, %p134
      %p136 = scmp.le.s32.totalorder 1, %s13
      %p137 = scmp.lt.s32.totalorder %s13, 3
      %p138 = pnand %p136, %p137
      %p139 = pneg %p138
      // Predicated region
      $region9: #{tpu_custom_call.1} parent=5 // pred_check
        _
      $region10: #{tpu_custom_call.1} parent=5 // pred_check_branch
        %141 = sbr.rel (%p138) target = $region12
      $region11: #{tpu_custom_call.1} parent=5 // pred_region
        %s142 = ssub.s32 %s13, 1
        // Predicated region
        $region13: #{tpu_custom_call.1} parent=11 // pred_check
          %p143 = pneg %p74
        $region14: #{tpu_custom_call.1} parent=11 // pred_check_branch
          %145 = sbr.rel (%p143) target = $region16
        $region15: #{tpu_custom_call.1} parent=11 // pred_region
          _
        $region16: #{tpu_custom_call.1} parent=11 // pred_fallthru
          _
      $region12: #{tpu_custom_call.1} parent=5 // pred_fallthru
        _
      %p146 = scmp.lt.s32.totalorder %s13, 2
      // Predicated region
      $region17: #{tpu_custom_call.1} parent=5 // pred_check
        %p147 = pneg %p146
      $region18: #{tpu_custom_call.1} parent=5 // pred_check_branch
        %149 = sbr.rel (%p147) target = $region20
      $region19: #{tpu_custom_call.1} parent=5 // pred_region
        // Predicated region
        $region21: #{tpu_custom_call.1} parent=19 // pred_check
          %p150 = pneg %p47
        $region22: #{tpu_custom_call.1} parent=19 // pred_check_branch
          %152 = sbr.rel (%p150) target = $region24
        $region23: #{tpu_custom_call.1} parent=19 // pred_region
          %s153 = smul.u32 2, %s21
          %p154 = scmp.lt.s32.totalorder %s20, 1
          %s155 = scalar_select %p154, %s20, 1
          %p156 = scmp.lt.s32.totalorder %s153, 1
          %s157 = scalar_select %p156, %s153, 1
          %s158 = smul.addr %s155, 10
          %s159 = sadd.s32 %s157, %s158
          %s160 = smul.addr %s159, 8
          %s161 = scalar_lea.vmem %s0, %s160
          %s162 = smul.u32 2, %s21
        $region24: #{tpu_custom_call.1} parent=19 // pred_fallthru
          _
      $region20: #{tpu_custom_call.1} parent=5 // pred_fallthru
        _
      %p163 = scmp.le.s32.totalorder 1, %s13
      %p164 = scmp.lt.s32.totalorder %s13, 3
      %p165 = pnand %p163, %p164
      %p166 = pneg %p165
      // Predicated region
      $region25: #{tpu_custom_call.1} parent=5 // pred_check
        _
      $region26: #{tpu_custom_call.1} parent=5 // pred_check_branch
        %168 = sbr.rel (%p165) target = $region28
      $region27: #{tpu_custom_call.1} parent=5 // pred_region
        %s169 = ssub.s32 %s13, 1
        %s170 = smul.u32 2, %s23
        %p171 = scmp.lt.s32.totalorder %s22, 1
        %s172 = scalar_select %p171, %s22, 1
        %p173 = scmp.lt.s32.totalorder %s170, 1
        %s174 = scalar_select %p173, %s170, 1
        %s175 = smul.addr %s172, 10
        %s176 = sadd.s32 %s174, %s175
        %s177 = smul.addr %s176, 8
        %s178 = scalar_lea.vmem %s0, %s177
        %p179 = pneg %p53
        %p180 = pneg %p50
        %p181 = pneg %p74
        %p182 = pneg %p71
        %p183 = pneg %p102
        %p184 = pneg %p99
        %s185 = sand.u32 %s89, 1
        %s186 = scalar_lea.sflag [#allocation3], %s185
        %s187 = sand.u32 %s89, 1
        %s188 = smul.addr %s187, 16
        %s189 = scalar_lea.vmem [#allocation2], %s188
        %p190 = pneg %p128
        %p191 = pneg %p125
        %p192 = scmp.lt.s32.totalorder %s22, 1
        %s193 = scalar_select %p192, %s22, 1
        %s194 = smul.addr %s193, 8
        %s195 = scalar_lea.vmem %s3, %s194
        %s196 = smul.u32 2, %s23
        %p197 = scmp.lt.s32.totalorder %s22, 1
        %s198 = scalar_select %p197, %s22, 1
        %p199 = scmp.lt.s32.totalorder %s196, 1
        %s200 = scalar_select %p199, %s196, 1
        %s201 = smul.addr %s198, 10
        %s202 = sadd.s32 %s200, %s201
        %s203 = smul.addr %s202, 8
        %s204 = scalar_lea.vmem %s0, %s203
        %s205 = smul.u32 2, %s23
        %s206 = smul.u32 2, %s23
        %p207 = scmp.lt.s32.totalorder %s22, 1
        %s208 = scalar_select %p207, %s22, 1
        %s209 = smul.addr %s208, 8
        %s210 = scalar_lea.vmem %s3, %s209
        %v211 = vld [vmem:[%s1] sm:$0xff]
        %v212 = vld [vmem:[%s204] sm:$0xff]
        %v213 = vld [vmem:[%s204 + $0x8] sm:$0xff]
        %v214 = vld [vmem:[%s204 + $0x10] sm:$0xff]
        %v215 = vld [vmem:[%s204 + $0x18] sm:$0xff]
        %v216 = vld [vmem:[%s204 + $0x20] sm:$0xff]
        %v217 = vld [vmem:[%s204 + $0x28] sm:$0xff]
        %v218 = vld [vmem:[%s204 + $0x30] sm:$0xff]
        %v219 = vld [vmem:[%s204 + $0x38] sm:$0xff]
        %v220 = vld [vmem:[%s204 + $0x40] sm:$0xf]
        %v221 = vld [vmem:[%s204 + $0x48] sm:$0xf]
        %vm222 = vcmask 293888
        %v224 = vsel %vm222, %v211, 0
        %vm226 = vcmask 1043456
        %v228 = vsel %vm226, %v220, 0
        %v231 = vsel %vm226, %v221, 0
        %233 = vmatprep.subr.mxu0 %v213
        %234 = vmatpush1.msra.mxu0 %v212
        %235 = vmatprep.subr.mxu0 %v215
        %236 = vmatpush1.msra.mxu0 %v214
        %237 = vmatprep.subr.mxu0 %v217
        %238 = vmatpush1.msra.mxu0 %v216
        %239 = vmatprep.subr.mxu0 %v219
        %240 = vmatpush1.msra.mxu0 %v218
        %241 = vmatprep.subr.mxu0 %v231
        %242 = vmatpush1.msra.mxu0 %v228
        %243 = vmatprep.subr.mxu0 0.0
        %244 = vmatpush1.msra.mxu0 0.0
        %245 = vmatprep.subr.mxu0 0.0
        %246 = vmatpush1.msra.mxu0 0.0
        %247 = vmatprep.subr.mxu0 0.0
        %248 = vmatpush1.msra.mxu0 0.0
        %249 = vmatprep.subr.mxu0 0.0
        %250 = vmatpush1.msra.mxu0 0.0
        %251 = vmatprep.subr.mxu0 0.0
        %252 = vmatpush1.msra.mxu0 0.0
        %253 = vmatprep.subr.mxu0 0.0
        %254 = vmatpush1.msra.mxu0 0.0
        %255 = vmatprep.subr.mxu0 0.0
        %256 = vmatpush1.msra.mxu0 0.0
        %257 = vmatprep.subr.mxu0 0.0
        %258 = vmatpush1.msra.mxu0 0.0
        %259 = vmatprep.subr.mxu0 0.0
        %260 = vmatpush1.msra.mxu0 0.0
        %261 = vmatprep.subr.mxu0 0.0
        %262 = vmatpush1.msra.mxu0 0.0
        %263 = vmatprep.subr.mxu0 0.0
        %264 = vmatpush1.msra.mxu0 0.0
        %265 = vmatprep.subr.mxu0 0.0
        %266 = vmatpush1.msra.mxu0 0.0
        %267 = vmatprep.subr.mxu0 0.0
        %268 = vmatpush1.msra.mxu0 0.0
        %269 = vmatprep.subr.mxu0 0.0
        %270 = vmatpush1.msra.mxu0 0.0
        %271 = vmatprep.subr.mxu0 0.0
        %272 = vmatpush1.msra.mxu0 0.0
        %273 = vmatprep.subr.mxu0 0.0
        %274 = vmatpush1.msra.mxu0 0.0
        %275 = vmatprep.subr.mxu0 0.0
        %276 = vmatpush1.msra.mxu0 0.0
        %277 = vmatprep.subr.mxu0 0.0
        %278 = vmatpush1.msra.mxu0 0.0
        %279 = vmatprep.subr.mxu0 0.0
        %280 = vmatpush1.msra.mxu0 0.0
        %281 = vmatprep.subr.mxu0 0.0
        %282 = vmatpush1.msra.mxu0 0.0
        %283 = vmatprep.subr.mxu0 0.0
        %284 = vmatpush1.msra.mxu0 0.0
        %285 = vmatprep.subr.mxu0 0.0
        %286 = vmatpush1.msra.mxu0 0.0
        %287 = vmatprep.subr.mxu0 0.0
        %288 = vmatpush1.msra.mxu0 0.0
        %289 = vmatprep.subr.mxu0 0.0
        %290 = vmatpush1.msra.mxu0 0.0
        %291 = vmatprep.subr.mxu0 0.0
        %292 = vmatpush1.msra.mxu0 0.0
        %293 = vmatprep.subr.mxu0 0.0
        %294 = vmatpush1.msra.mxu0 0.0
        %295 = vmatprep.subr.mxu0 0.0
        %296 = vmatpush1.msra.mxu0 0.0
        %297 = vmatprep.mubr.f32.mxu0 0.0
        %298 = vmatmul.mubr.f32.gmra.mrb[0].mxu0 %v224
        %v299 = vpop.f32.mrb[0].mxu0
        %v300 = vadd.f32 0.0, %v299
        %v301 = vpop.f32.mrb[0].mxu0
        %v302 = vadd.f32 0.0, %v301
        %303 = vdwg.mxu0
        %304 = vst [vmem:[%s189] sm:$0xff] %v300
        %305 = vst [vmem:[%s189 + $0x8] sm:$0xff] %v302
        %p306 = scmp.eq.s32.totalorder %s23, 0
        // Predicated region
        $region29: #{tpu_custom_call.1} parent=27 // pred_check
          %p307 = pneg %p306
        $region30: #{tpu_custom_call.1} parent=27 // pred_check_branch
          %309 = sbr.rel (%p307) target = $region32
        $region31: #{tpu_custom_call.1} parent=27 // pred_region
          %vm310 = vcmask 15360
          %311 = vst.msk [vmem:[%s210] sm:$0xff] %vm310, 0.0
        $region32: #{tpu_custom_call.1} parent=27 // pred_fallthru
          _
        %v312 = vadd.f32 %v300, %v302
        %313 = vadd.xlane.f32.xlu0 %v312
        %v314 = vpop.xlane.xlu0 %313
        %v315 = vmul.f32 %v300, %v300
        %v316 = vmul.f32 %v302, %v302
        %v317 = vadd.f32 %v315, %v316
        %318 = vadd.xlane.f32.xlu0 %v317
        %v319 = vpop.xlane.xlu0 %318
        %v320 = vld [vmem:[%s210] sm:$0xff]
        %vm321 = vcmask 7168
        %v322 = vsel %vm321, %v314, %v319
        %v323 = vadd.f32 %v320, %v322
        %vm324 = vcmask 15360
        %325 = vst.msk [vmem:[%s210] sm:$0xff] %vm324, %v323
        %s326 = sand.u32 %s89, 1
        %s327 = scalar_lea.sflag [#allocation3], %s326
        %s328 = sand.u32 %s89, 1
        %s329 = smul.addr %s328, 16
        %s330 = scalar_lea.vmem [#allocation2], %s329
        %p331 = scmp.lt.s32.totalorder %s22, 1
        %s332 = scalar_select %p331, %s22, 1
        %s333 = smul.addr %s332, 8
        %s334 = scalar_lea.vmem %s3, %s333
        // Predicated region
        $region33: #{tpu_custom_call.1} parent=27 // pred_check
          %p335 = pneg %p99
        $region34: #{tpu_custom_call.1} parent=27 // pred_check_branch
          %337 = sbr.rel (%p335) target = $region36
        $region35: #{tpu_custom_call.1} parent=27 // pred_region
          %s338 = smul.u32 2, %s23
          %s340 = ssub.s32 256, 256
          %341 = vsyncadd %s327, %s340
          %s342 = smul.addr %s22, 2
          %s343 = sadd.s32 %s338, %s342
          %s344 = smul.addr %s343, 128
          %s345 = scalar_lea.hbm %s2, %s344
          %s347 = sshll.u32 %s330, 4
          %s348 = int_to_ptr.vmem [resolvable:$true] %s347
          %350 = dma.vmem_to_hbm [thread:$0]  %s348, 256, %s345, %s327
        $region36: #{tpu_custom_call.1} parent=27 // pred_fallthru
          _
        // Predicated region
        $region37: #{tpu_custom_call.1} parent=27 // pred_check
          %p351 = pneg %p125
        $region38: #{tpu_custom_call.1} parent=27 // pred_check_branch
          %353 = sbr.rel (%p351) target = $region40
        $region39: #{tpu_custom_call.1} parent=27 // pred_region
          _
        $region40: #{tpu_custom_call.1} parent=27 // pred_fallthru
          _
      $region28: #{tpu_custom_call.1} parent=5 // pred_fallthru
        _
      %p354 = scmp.le.s32.totalorder 2, %s13
      // Predicated region
      $region41: #{tpu_custom_call.1} parent=5 // pred_check
        %p355 = pneg %p354
      $region42: #{tpu_custom_call.1} parent=5 // pred_check_branch
        %357 = sbr.rel (%p355) target = $region44
      $region43: #{tpu_custom_call.1} parent=5 // pred_region
        %s358 = ssub.s32 %s13, 2
        // Predicated region
        $region45: #{tpu_custom_call.1} parent=43 // pred_check
          %p359 = pneg %p105
        $region46: #{tpu_custom_call.1} parent=43 // pred_check_branch
          %361 = sbr.rel (%p359) target = $region48
        $region47: #{tpu_custom_call.1} parent=43 // pred_region
          %s362 = sand.u32 %s90, 1
          %s363 = scalar_lea.sflag [#allocation3], %s362
          %s364 = sand.u32 %s90, 1
          %s365 = smul.addr %s364, 16
          %s366 = scalar_lea.vmem [#allocation2], %s365
          %367 = dma.done %s363, 256
        $region48: #{tpu_custom_call.1} parent=43 // pred_fallthru
          _
        // Predicated region
        $region49: #{tpu_custom_call.1} parent=43 // pred_check
          %p368 = pneg %p131
        $region50: #{tpu_custom_call.1} parent=43 // pred_check_branch
          %370 = sbr.rel (%p368) target = $region52
        $region51: #{tpu_custom_call.1} parent=43 // pred_region
          %p371 = scmp.lt.s32.totalorder %s24, 1
          %s372 = scalar_select %p371, %s24, 1
          %s373 = smul.addr %s372, 8
          %s374 = scalar_lea.vmem %s3, %s373
        $region52: #{tpu_custom_call.1} parent=43 // pred_fallthru
          _
      $region44: #{tpu_custom_call.1} parent=5 // pred_fallthru
        _
    $region6: #{tpu_custom_call.1} parent=1 // loop_footer
      %s17 = sadd.s32 1, %s13
    $region7: #{tpu_custom_call.1} parent=1 // loop_footer_branch
      %12 = sbr.rel target = $region3
    $region8: #{tpu_custom_call.1} parent=1 // loop_exit
      _
    %375 = vsyncpa [#allocation3], 1
    %s376 = scalar_lea.sflag [#allocation3], 1
    %377 = vsyncpa %s376, 1

</llo_original>
